<compile_context>
chip_gen: v6e
topology: v6e:2x2x1
jax: 0.10.0
libtpu: 0.0.40
codegen_flags: <defaults>
</compile_context>

<pallas_src>
import jax
import jax.numpy as jnp
import numpy as np
from jax.experimental import pallas as pl
from jax.experimental.pallas import tpu as pltpu

# CLIP preprocessing constants (from the PyTorch module).
MU = (0.48145466, 0.4578275, 0.40821073)
STD = (0.26862954, 0.26130258, 0.27577711)

LANE = 128      # TPU lane width  (last dim)
SUBLANE = 8     # TPU sublane width (second-to-last dim)
NORM_EPS = 1e-12


def _round_up(n, m):
    return ((n + m - 1) // m) * m


def _pad_axis(x, axis, multiple):
    pad = (-x.shape[axis]) % multiple
    if pad == 0:
        return x
    widths = [(0, 0)] * x.ndim
    widths[axis] = (0, pad)
    return jnp.pad(x, widths)


def _fold_normalizer(w_enc, H, W):
    """Fold ImageNormalizer into the encoder projection (exact algebra, f32):
       (x - mean)/std @ W  ==  x @ w_prime + bias."""
    inv_std = jnp.repeat(1.0 / jnp.asarray(STD, jnp.float32), H * W)   # [CHW]
    mean = jnp.repeat(jnp.asarray(MU, jnp.float32), H * W)             # [CHW]
    w32 = w_enc.astype(jnp.float32)
    w_prime = w32 * inv_std[:, None]                                   # [CHW, D]
    bias = -(mean * inv_std) @ w32                                     # [D]
    return w_prime, bias


# ---------------------------------------------------------------------------
# Kernel
# ---------------------------------------------------------------------------
def _clip_kernel(x_ref, w_ref, b_ref, t_ref, scale_ref, o_ref, acc_ref):
    """Grid point k: one CHW reduction step.  Whole batch is resident.

      x_ref:     [Bp, tk]  image pixels (flattened NCHW slice), f32
      w_ref:     [tk, Dp]  encoder weights with 1/std folded in (compute dtype)
      b_ref:     [1,  Dp]  f32 bias = -(mean/std) @ W   (normalizer fold)
      t_ref:     [Dp, Kp]  text_features.T (L2-normalized, zero-padded)
      scale_ref: [1]       exp(logit_scale)  (SMEM scalar)
      o_ref:     [Bp, Kp]  f32 logits   (written once, on the last step)
      acc_ref:   [Bp, Dp]  f32 accumulator scratch (persists across k)
    """
    k = pl.program_id(0)

    @pl.when(k == 0)
    def _():
        # Initialise with the folded-normalizer bias: saves a separate add.
        acc_ref[...] = jnp.broadcast_to(b_ref[...], acc_ref.shape)

    # encode_image contraction.  The f32 -> compute-dtype cast of the image
    # tile happens in VMEM (VPU), hidden under the (dominant) W-tile DMA.
    x = x_ref[...].astype(w_ref.dtype)
    acc_ref[...] += jnp.dot(x, w_ref[...], preferred_element_type=jnp.float32)

    # Fused epilogue on the last reduction step, while feat is still in VMEM.
    @pl.when(k == pl.num_programs(0) - 1)
    def _():
        feat = acc_ref[...]                                       # [Bp, Dp] f32
        # image_features / image_features.norm(dim=-1, keepdim=True),
        # with logit_scale.exp() folded into the per-row scale (rows are unit
        # norm, so scale * feat stays well inside the compute-dtype range).
        inv_norm = jax.lax.rsqrt(
            jnp.sum(feat * feat, axis=-1, keepdims=True) + NORM_EPS)
        feat = feat * (inv_norm * scale_ref[0])
        # image_features @ text_features.t()
        o_ref[...] = jnp.dot(feat.astype(t_ref.dtype), t_ref[...],
                             preferred_element_type=jnp.float32)


# ---------------------------------------------------------------------------
# One-time setup (weights are static: call once, reuse across forward calls)
# ---------------------------------------------------------------------------
def prepare_custom_clip(w_enc, text_features, logit_scale, image_hw, *,
                        compute_dtype=jnp.bfloat16, tk=3072):
    """Fold the ImageNormalizer into the encoder projection, pad / cast the
    static operands, and precompute exp(logit_scale).  Returns a dict to pass
    to custom_clip_forward.  For real CLIP shapes (CHW=150528) the default
    tk=3072 divides CHW exactly (49 reduction steps)."""
    H, W = image_hw
    D = w_enc.shape[-1]
    K = text_features.shape[0]
    chw = 3 * H * W

    # Reduction tile: multiple of 256 (MXU-native on v6e/v7x), never bigger
    # than the (padded) contraction itself.
    tk_eff = _round_up(min(int(tk), _round_up(chw, 256)), 256)
    CHWp = _round_up(chw, tk_eff)
    Dp = _round_up(D, LANE)
    Kp = _round_up(K, LANE)

    w_prime, bias = _fold_normalizer(w_enc, H, W)
    w_p = _pad_axis(_pad_axis(w_prime, 0, tk_eff), 1, LANE).astype(compute_dtype)
    b_p = _pad_axis(bias[None, :], 1, LANE)                          # [1, Dp] f32
    t_p = _pad_axis(_pad_axis(text_features.T.astype(jnp.float32), 0, LANE),
                    1, LANE).astype(compute_dtype)                   # [Dp, Kp]
    scale = jnp.exp(jnp.asarray([logit_scale], jnp.float32))         # [1] (SMEM)

    return dict(w_p=w_p, b_p=b_p, t_p=t_p, scale=scale,
                chw=chw, CHWp=CHWp, tk=tk_eff, D=D, Dp=Dp, K=K, Kp=Kp,
                compute_dtype=compute_dtype)


# ---------------------------------------------------------------------------
# Forward
# ---------------------------------------------------------------------------
def custom_clip_forward(image, prep):
    """CustomCLIP.forward.  image: [B, 3, H, W] f32 (NCHW) -> logits [B, K]."""
    B, C, H, W = image.shape
    assert C == 3, "CLIP ImageNormalizer expects 3 channels"
    chw = C * H * W
    assert chw == prep["chw"], "image spatial shape does not match prep"
    tk, CHWp, Dp, Kp, K = prep["tk"], prep["CHWp"], prep["Dp"], prep["Kp"], prep["K"]
    cdt = prep["compute_dtype"]
    itemsize = jnp.dtype(cdt).itemsize

    Bp = _round_up(B, SUBLANE)
    # Image stays f32; the compute-dtype cast happens inside the kernel.
    x_p = _pad_axis(_pad_axis(image.reshape(B, chw).astype(jnp.float32),
                              0, SUBLANE), 1, tk)                    # [Bp, CHWp]

    # ---- VMEM sizing (double-buffer everything the pipeline may buffer) ----
    est = (Bp * tk * 4 * 2            # x tiles (f32)
           + tk * Dp * itemsize * 2   # W tiles
           + Dp * 4 * 2               # bias (grid-invariant)
           + Dp * Kp * itemsize * 2   # text features (grid-invariant)
           + Bp * Kp * 4 * 2          # output block
           + Bp * Dp * 4)             # accumulator scratch
    budget = 48 * 1024 * 1024         # safe on all generations (v7x: 64 MiB physical)
    if est > budget:
        # TODO(synk): add a k-outer / batch-tiled variant for very large batches.
        raise ValueError(f"batch too large for resident-batch kernel "
                         f"(needs ~{est>>20} MiB VMEM); reduce batch or tk")
    vmem_limit = int(min(budget, est + (8 << 20)))

    grid = (CHWp // tk,)
    cost = pl.CostEstimate(
        flops=2 * Bp * CHWp * Dp + 2 * Bp * Dp * Kp,
        transcendentals=Bp,                                   # one rsqrt per row
        bytes_accessed=(x_p.size * 4
                        + prep["w_p"].size * itemsize         # W read exactly once
                        + prep["t_p"].size * itemsize
                        + prep["b_p"].size * 4
                        + Bp * Kp * 4),
    )

    out = pl.pallas_call(
        _clip_kernel,
        out_shape=jax.ShapeDtypeStruct((Bp, Kp), jnp.float32),
        grid_spec=pltpu.PrefetchScalarGridSpec(
            num_scalar_prefetch=0,
            grid=grid,
            in_specs=[
                pl.BlockSpec((Bp, tk), lambda k: (0, k)),       # image tile (f32)
                pl.BlockSpec((tk, Dp), lambda k: (k, 0)),       # weight tile (streamed once)
                pl.BlockSpec((1, Dp), lambda k: (0, 0)),        # bias (resident)
                pl.BlockSpec((Dp, Kp), lambda k: (0, 0)),       # text features (resident)
                pl.BlockSpec(memory_space=pltpu.MemorySpace.SMEM),  # exp(logit_scale)
            ],
            # Constant block index -> logits stay in VMEM, written back once.
            out_specs=pl.BlockSpec((Bp, Kp), lambda k: (0, 0)),
            scratch_shapes=[pltpu.VMEM((Bp, Dp), jnp.float32)],
        ),
        compiler_params=pltpu.CompilerParams(
            # Single reduction axis: no megacore batch split, so v7x's two TCs
            # never duplicate the dominant W stream.
            dimension_semantics=("arbitrary",),
            vmem_limit_bytes=vmem_limit,
        ),
        cost_estimate=cost,
    )(x_p, prep["w_p"], prep["b_p"], prep["t_p"], prep["scale"])

    return out[:B, :K]


# ---------------------------------------------------------------------------
# References (for the self-test)
# ---------------------------------------------------------------------------
def _matched_reference(image, w_enc, text_features, logit_scale, compute_dtype):
    """Numerics-matched plain-JAX reference: same normalizer fold, same operand
    dtypes / f32 accumulation, same scale-into-norm fold as the kernel."""
    B, C, H, W = image.shape
    chw = C * H * W
    w_prime, bias = _fold_normalizer(w_enc, H, W)
    x = image.reshape(B, chw).astype(jnp.float32).astype(compute_dtype)
    feat = bias + jnp.dot(x, w_prime.astype(compute_dtype),
                          preferred_element_type=jnp.float32)
    inv = jax.lax.rsqrt(jnp.sum(feat * feat, axis=-1, keepdims=True) + NORM_EPS)
    feat = feat * (inv * jnp.exp(jnp.float32(logit_scale)))
    t = text_features.T.astype(jnp.float32).astype(compute_dtype)
    return jnp.dot(feat.astype(compute_dtype), t, preferred_element_type=jnp.float32)


def _np64_references(image, w_enc, text_features, logit_scale):
    """Float64 numpy references (unfolded PyTorch-mirroring, folded): verifies
    the normalizer fold is exact algebra, independent of TPU matmul precision."""
    img = np.asarray(image, np.float64)
    w = np.asarray(w_enc, np.float64)
    t = np.asarray(text_features, np.float64)
    B, C, H, W = img.shape
    # Unfolded: exactly CustomCLIP.forward.
    mean = np.asarray(MU, np.float64).reshape(1, 3, 1, 1)
    std = np.asarray(STD, np.float64).reshape(1, 3, 1, 1)
    x = (img - mean) / std
    feat = x.reshape(B, -1) @ w
    feat = feat / np.linalg.norm(feat, axis=-1, keepdims=True)
    unfolded = np.exp(logit_scale) * feat @ t.T
    # Folded: what the kernel computes (before dtype casts).
    inv_std = np.repeat(1.0 / np.asarray(STD, np.float64), H * W)
    mean_f = np.repeat(np.asarray(MU, np.float64), H * W)
    feat2 = img.reshape(B, -1) @ (w * inv_std[:, None]) - (mean_f * inv_std) @ w
    feat2 = feat2 / np.linalg.norm(feat2, axis=-1, keepdims=True)
    folded = np.exp(logit_scale) * feat2 @ t.T
    return unfolded, folded


if __name__ == "__main__":
    # Small deterministic shapes: batch=2, channels=3 (required), spatial=16,
    # embed dim=32, num classes=8.
    B, C, H, W = 2, 3, 16, 16
    D, K = 32, 8

    key = jax.random.PRNGKey(0)
    k_img, k_w, k_txt = jax.random.split(key, 3)

    image = jax.random.uniform(k_img, (B, C, H, W), jnp.float32)         # pixels in [0,1]
    w_enc = jax.random.normal(k_w, (C * H * W, D), jnp.float32) * 0.02   # synthetic encoder
    text_raw = jax.random.normal(k_txt, (K, D), jnp.float32)
    # cls_tfeatures are stored L2-normalized (set_prompts does it once, outside forward).
    text_features = text_raw / jnp.linalg.norm(text_raw, axis=-1, keepdims=True)
    logit_scale = float(np.log(1.0 / 0.07))                              # CLIP init

    # One-time weight-side prep (hoisted out of the forward path).
    prep = prepare_custom_clip(w_enc, text_features, logit_scale, (H, W))
    prep = jax.tree_util.tree_map(
        lambda v: jax.block_until_ready(v) if isinstance(v, jax.Array) else v, prep)

    logits = custom_clip_forward(image, prep)
    logits = jax.block_until_ready(logits)
    assert logits.shape == (B, K)

    # (1) The normalizer fold is algebraically exact (float64 numpy check,
    #     independent of any hardware matmul precision).
    ref64, fold64 = _np64_references(image, w_enc, text_features, logit_scale)
    np.testing.assert_allclose(fold64, ref64, rtol=1e-9, atol=1e-9)

    # (2) Kernel mechanics (tiling, resident accumulator, epilogue, padding)
    #     vs a numerics-matched plain-JAX reference using the same bf16 operands.
    ref_matched = _matched_reference(image, w_enc, text_features, logit_scale,
                                     jnp.bfloat16)
    np.testing.assert_allclose(np.asarray(logits), np.asarray(ref_matched),
                               rtol=5e-3, atol=5e-3)

    # (3) End-to-end sanity vs the exact PyTorch-mirroring forward; the bound
    #     only needs to cover bf16 operand quantization of the matmuls.
    np.testing.assert_allclose(np.asarray(logits), ref64.astype(np.float32),
                               rtol=5e-2, atol=2.5e-1)

    print("KERNEL_OK")
</pallas_src>

<mosaic_0001>
module attributes {stable_mosaic.version = 11 : i64} {
  func.func @_clip_kernel(%arg0: i32, %arg1: memref<8x768xf32, #tpu.memory_space<vmem>>, %arg2: memref<768x128xbf16, #tpu.memory_space<vmem>>, %arg3: memref<1x128xf32, #tpu.memory_space<vmem>>, %arg4: memref<128x128xbf16, #tpu.memory_space<vmem>>, %arg5: memref<1xf32, #tpu.memory_space<smem>>, %arg6: memref<8x128xf32, #tpu.memory_space<vmem>>, %arg7: memref<8x128xf32, #tpu.memory_space<vmem>>) attributes {dimension_semantics = [#tpu.dimension_semantics<arbitrary>], iteration_bounds = array<i64: 1>, scalar_prefetch = 0 : i64, scratch_operands = 1 : i64, tpu.core_type = #tpu.core_type<tc>, window_params = [{transform_indices = @transform_0, window_bounds = array<i64: 8, 768>}, {transform_indices = @transform_1, window_bounds = array<i64: 768, 128>}, {pipeline_mode = #tpu.pipeline_mode<synchronous>, transform_indices = @transform_2, window_bounds = array<i64: 1, 128>}, {pipeline_mode = #tpu.pipeline_mode<synchronous>, transform_indices = @transform_3, window_bounds = array<i64: 128, 128>}, {transform_indices = @transform_4, window_bounds = array<i64: 1>}, {pipeline_mode = #tpu.pipeline_mode<synchronous>, transform_indices = @transform_5, window_bounds = array<i64: 8, 128>}]} {
    %c0_i32 = arith.constant 0 : i32
    %0 = arith.cmpi eq, %arg0, %c0_i32 : i32
    %1 = arith.extui %0 : i1 to i32
    %c0_i32_0 = arith.constant 0 : i32
    %2 = arith.cmpi ne, %1, %c0_i32_0 : i32
    scf.if %2 {
      %c0_10 = arith.constant 0 : index
      %c0_11 = arith.constant 0 : index
      %13 = vector.load %arg3[%c0_10, %c0_11] : memref<1x128xf32, #tpu.memory_space<vmem>>, vector<1x128xf32>
      %14 = vector.shape_cast %13 : vector<1x128xf32> to vector<1x128xf32>
      %15 = vector.broadcast %14 : vector<1x128xf32> to vector<8x128xf32>
      %c0_12 = arith.constant 0 : index
      %c0_13 = arith.constant 0 : index
      %16 = vector.load %arg7[%c0_12, %c0_13] : memref<8x128xf32, #tpu.memory_space<vmem>>, vector<8x128xf32>
      tpu.vector_store %arg7[%c0_12, %c0_13], %15 {strides = array<i32>} : memref<8x128xf32, #tpu.memory_space<vmem>>, vector<8x128xf32>,
    } else {
    }
    %c0 = arith.constant 0 : index
    %c0_1 = arith.constant 0 : index
    %3 = vector.load %arg1[%c0, %c0_1] : memref<8x768xf32, #tpu.memory_space<vmem>>, vector<8x768xf32>
    %4 = arith.truncf %3 : vector<8x768xf32> to vector<8x768xbf16>
    %c0_2 = arith.constant 0 : index
    %c0_3 = arith.constant 0 : index
    %5 = vector.load %arg7[%c0_2, %c0_3] : memref<8x128xf32, #tpu.memory_space<vmem>>, vector<8x128xf32>
    %c0_4 = arith.constant 0 : index
    %c0_5 = arith.constant 0 : index
    %6 = vector.load %arg2[%c0_4, %c0_5] : memref<768x128xbf16, #tpu.memory_space<vmem>>, vector<768x128xbf16>
    %cst = arith.constant dense<0.000000e+00> : vector<8x128xf32>
    %7 = tpu.matmul %4, %6, %cst {dimension_numbers = #tpu.dot_dimension_numbers<[1], [0], [0], [1], [0, 0, 1, 1], [], []>} : vector<8x768xbf16>, vector<768x128xbf16>, vector<8x128xf32> -> vector<8x128xf32>
    %8 = arith.addf %5, %7 : vector<8x128xf32>
    %c0_6 = arith.constant 0 : index
    %c0_7 = arith.constant 0 : index
    %9 = vector.load %arg7[%c0_6, %c0_7] : memref<8x128xf32, #tpu.memory_space<vmem>>, vector<8x128xf32>
    tpu.vector_store %arg7[%c0_6, %c0_7], %8 {strides = array<i32>} : memref<8x128xf32, #tpu.memory_space<vmem>>, vector<8x128xf32>,
    %c0_i32_8 = arith.constant 0 : i32
    %10 = arith.cmpi eq, %arg0, %c0_i32_8 : i32
    %11 = arith.extui %10 : i1 to i32
    %c0_i32_9 = arith.constant 0 : i32
    %12 = arith.cmpi ne, %11, %c0_i32_9 : i32
    scf.if %12 {
      %c0_10 = arith.constant 0 : index
      %c0_11 = arith.constant 0 : index
      %13 = vector.load %arg7[%c0_10, %c0_11] : memref<8x128xf32, #tpu.memory_space<vmem>>, vector<8x128xf32>
      %14 = arith.mulf %13, %13 : vector<8x128xf32>
      %cst_12 = arith.constant dense<0.000000e+00> : vector<8xf32>
      %15 = vector.multi_reduction <add>, %14, %cst_12 [1] : vector<8x128xf32> to vector<8xf32>
      %16 = vector.shape_cast %15 : vector<8xf32> to vector<8x1xf32>
      %cst_13 = arith.constant 9.99999996E-13 : f32
      %17 = vector.broadcast %cst_13 : f32 to vector<8x1xf32>
      %18 = arith.addf %16, %17 : vector<8x1xf32>
      %19 = math.rsqrt %18 : vector<8x1xf32>
      %c0_14 = arith.constant 0 : index
      %20 = memref.load %arg5[%c0_14] : memref<1xf32, #tpu.memory_space<smem>>
      %21 = vector.broadcast %20 : f32 to vector<8x1xf32>
      %22 = arith.mulf %19, %21 : vector<8x1xf32>
      %23 = vector.broadcast %22 : vector<8x1xf32> to vector<8x128xf32>
      %24 = arith.mulf %13, %23 : vector<8x128xf32>
      %25 = arith.truncf %24 : vector<8x128xf32> to vector<8x128xbf16>
      %c0_15 = arith.constant 0 : index
      %c0_16 = arith.constant 0 : index
      %26 = vector.load %arg4[%c0_15, %c0_16] : memref<128x128xbf16, #tpu.memory_space<vmem>>, vector<128x128xbf16>
      %cst_17 = arith.constant dense<0.000000e+00> : vector<8x128xf32>
      %27 = tpu.matmul %25, %26, %cst_17 {dimension_numbers = #tpu.dot_dimension_numbers<[1], [0], [0], [1], [0, 0, 1, 1], [], []>} : vector<8x128xbf16>, vector<128x128xbf16>, vector<8x128xf32> -> vector<8x128xf32>
      %c0_18 = arith.constant 0 : index
      %c0_19 = arith.constant 0 : index
      %28 = vector.load %arg6[%c0_18, %c0_19] : memref<8x128xf32, #tpu.memory_space<vmem>>, vector<8x128xf32>
      tpu.vector_store %arg6[%c0_18, %c0_19], %27 {strides = array<i32>} : memref<8x128xf32, #tpu.memory_space<vmem>>, vector<8x128xf32>,
    } else {
    }
    return
  }
  func.func @transform_0(%arg0: i32) -> (i32, i32) {
    %c0_i32 = arith.constant 0 : i32
    %c0_i32_0 = arith.constant 0 : i32
    return %c0_i32, %arg0 : i32, i32
  }
  func.func @transform_1(%arg0: i32) -> (i32, i32) {
    %c0_i32 = arith.constant 0 : i32
    %c0_i32_0 = arith.constant 0 : i32
    return %arg0, %c0_i32 : i32, i32
  }
  func.func @transform_2(%arg0: i32) -> (i32, i32) {
    %c0_i32 = arith.constant 0 : i32
    %c0_i32_0 = arith.constant 0 : i32
    %c0_i32_1 = arith.constant 0 : i32
    return %c0_i32, %c0_i32_0 : i32, i32
  }
  func.func @transform_3(%arg0: i32) -> (i32, i32) {
    %c0_i32 = arith.constant 0 : i32
    %c0_i32_0 = arith.constant 0 : i32
    %c0_i32_1 = arith.constant 0 : i32
    return %c0_i32, %c0_i32_0 : i32, i32
  }
  func.func @transform_4(%arg0: i32) -> i32 {
    %c0_i32 = arith.constant 0 : i32
    %c0_i32_0 = arith.constant 0 : i32
    return %c0_i32 : i32
  }
  func.func @transform_5(%arg0: i32) -> (i32, i32) {
    %c0_i32 = arith.constant 0 : i32
    %c0_i32_0 = arith.constant 0 : i32
    %c0_i32_1 = arith.constant 0 : i32
    return %c0_i32, %c0_i32_0 : i32, i32
  }
}

</mosaic_0001>

<llo_original>
// kernel: tpu_custom_call.1
$region0: #{tpu_custom_call.1}
  #allocation0 [shape = 'u32[]', space=smem, size = 0x4, offset = 0x4, fixed_abs, tag = 'smem constant byte address 0x4 - core index']
  #allocation1 [shape = 'u32[144,128]{1,0:T(1,128)}', space=vmem, size = 0x12000, scoped, tag = 'internal scratch']
  #allocation2 [shape = 'f32[8,128]{1,0:T(8,128)}', space=vmem, size = 0x1000, scoped, tag = 'scratch operand']
  #allocation3 [shape = 'f32[1]{0:T(128)S(6)}', space=smem, size = 0x200, scoped, tag = 'scoped memory for tpu_custom_call.1']
  %s0 = inlined_call_operand.hbm [shape: f32[8,768], index: 0, kind: input, shape index: {}]
  %s1 = inlined_call_operand.hbm [shape: bf16[768,128], index: 1, kind: input, shape index: {}]
  %s2 = inlined_call_operand.vmem [shape: f32[1,128], index: 2, kind: input, shape index: {}]
  %s3 = inlined_call_operand.hbm [shape: bf16[128,128], index: 3, kind: input, shape index: {}]
  %s4 = inlined_call_operand.<no memory space> [shape: f32[1], index: 4, kind: input, shape index: {}]
  %s5 = inlined_call_operand.hbm [shape: f32[8,128], index: 5, kind: output, shape index: {}]
  %s6 = sld [smem:[#allocation0]]
  $region50: #{tpu_custom_call.1} parent=0
    _
  %s8 = ssub.s32 1, %s6
  %s9 = scalar_select 0, %s8, %s6
  %10 = sst [smem:[#allocation3]] %s4
  $region1: #{tpu_custom_call.1} parent=0
    #allocation4 [shape = 'u8[24576]{0}', space=vmem, size = 0x6000, scoped, tag = 'input window, operand 0, single buffered']
    #allocation5 [shape = 's32[1]{0}', space=sflag, size = 0x4, scoped, tag = 'scoped memory for tpu_custom_call.1']
    #allocation6 [shape = 's32[1]{0}', space=sflag, size = 0x4, scoped, tag = 'scoped memory for tpu_custom_call.1']
    #allocation7 [shape = 'u8[196608]{0}', space=vmem, size = 0x30000, scoped, tag = 'input window, operand 1, single buffered']
    #allocation8 [shape = 's32[1]{0}', space=sflag, size = 0x4, scoped, tag = 'scoped memory for tpu_custom_call.1']
    #allocation9 [shape = 'u8[32768]{0}', space=vmem, size = 0x8000, scoped, tag = 'input window, operand 3, single buffered']
    #allocation10 [shape = 'u8[4096]{0}', space=vmem, size = 0x1000, scoped, tag = 'output window, operand 0, single buffered']
    %11 = vsyncpa [#allocation5], 0
    %12 = vsyncpa [#allocation8], 0
    %13 = vsyncpa [#allocation6], 0
    // Predicated region
    $region2: #{tpu_custom_call.1} parent=1 // pred_check
      _
    $region3: #{tpu_custom_call.1} parent=1 // pred_check_branch
      %15 = sbr.rel (0) target = $region5
    $region4: #{tpu_custom_call.1} parent=1 // pred_region
      %s17 = ssub.s32 768, 768
      %18 = vsyncadd [#allocation5], %s17
      %s20 = sshll.u32 [#allocation4], 4
      %s21 = int_to_ptr.vmem [resolvable:$true] %s20
      %23 = dma.hbm_to_vmem [thread:$0]  %s0, 768, %s21, [#allocation5]
    $region5: #{tpu_custom_call.1} parent=1 // pred_fallthru
      _
    // Predicated region
    $region6: #{tpu_custom_call.1} parent=1 // pred_check
      _
    $region7: #{tpu_custom_call.1} parent=1 // pred_check_branch
      %25 = sbr.rel (0) target = $region9
    $region8: #{tpu_custom_call.1} parent=1 // pred_region
      %s27 = ssub.s32 6144, 6144
      %28 = vsyncadd [#allocation8], %s27
      %s29 = sshll.u32 [#allocation7], 4
      %s30 = int_to_ptr.vmem [resolvable:$true] %s29
      %35 = dma.hbm_to_vmem [thread:$0]  %s1, 6144, %s30, [#allocation8], 64, 64, 4
    $region9: #{tpu_custom_call.1} parent=1 // pred_fallthru
      _
    // Predicated region
    $region10: #{tpu_custom_call.1} parent=1 // pred_check
      _
    $region11: #{tpu_custom_call.1} parent=1 // pred_check_branch
      %37 = sbr.rel (0) target = $region13
    $region12: #{tpu_custom_call.1} parent=1 // pred_region
      _
    $region13: #{tpu_custom_call.1} parent=1 // pred_fallthru
      _
    // Predicated region
    $region14: #{tpu_custom_call.1} parent=1 // pred_check
      _
    $region15: #{tpu_custom_call.1} parent=1 // pred_check_branch
      %39 = sbr.rel (0) target = $region17
    $region16: #{tpu_custom_call.1} parent=1 // pred_region
      %s41 = ssub.s32 1024, 1024
      %42 = vsyncadd [#allocation8], %s41
      %s43 = sshll.u32 [#allocation9], 4
      %s44 = int_to_ptr.vmem [resolvable:$true] %s43
      %49 = dma.hbm_to_vmem [thread:$0]  %s3, 1024, %s44, [#allocation8], 64, 64, 4
    $region17: #{tpu_custom_call.1} parent=1 // pred_fallthru
      _
    // Predicated region
    $region18: #{tpu_custom_call.1} parent=1 // pred_check
      _
    $region19: #{tpu_custom_call.1} parent=1 // pred_check_branch
      %51 = sbr.rel (0) target = $region21
    $region20: #{tpu_custom_call.1} parent=1 // pred_region
      _
    $region21: #{tpu_custom_call.1} parent=1 // pred_fallthru
      _
    // Predicated region
    $region22: #{tpu_custom_call.1} parent=1 // pred_check
      _
    $region23: #{tpu_custom_call.1} parent=1 // pred_check_branch
      %53 = sbr.rel (0) target = $region25
    $region24: #{tpu_custom_call.1} parent=1 // pred_region
      %54 = dma.done [#allocation5], 768
    $region25: #{tpu_custom_call.1} parent=1 // pred_fallthru
      _
    // Predicated region
    $region26: #{tpu_custom_call.1} parent=1 // pred_check
      _
    $region27: #{tpu_custom_call.1} parent=1 // pred_check_branch
      %56 = sbr.rel (0) target = $region29
    $region28: #{tpu_custom_call.1} parent=1 // pred_region
      %57 = dma.done [#allocation8], 6144
    $region29: #{tpu_custom_call.1} parent=1 // pred_fallthru
      _
    // Predicated region
    $region30: #{tpu_custom_call.1} parent=1 // pred_check
      _
    $region31: #{tpu_custom_call.1} parent=1 // pred_check_branch
      %59 = sbr.rel (0) target = $region33
    $region32: #{tpu_custom_call.1} parent=1 // pred_region
      %60 = dma.done [#allocation8], 1024
    $region33: #{tpu_custom_call.1} parent=1 // pred_fallthru
      _
    %p62 = scmp.eq.s32.totalorder 0, 0
    // Predicated region
    $region34: #{tpu_custom_call.1} parent=1 // pred_check
      %p63 = pneg %p62
    $region35: #{tpu_custom_call.1} parent=1 // pred_check_branch
      %65 = sbr.rel (%p63) target = $region37
    $region36: #{tpu_custom_call.1} parent=1 // pred_region
      %v66 = vld [vmem:[%s2] sm:$0x1]
      %v68 = vlaneseq
      %v69 = vshrl.u32 %v68, 7
      %v70 = vsub.s32 0, %v69
      %v71 = vrot.slane %v66, %v70
      %73 = vst [vmem:[#allocation2] sm:$0xff] %v71
    $region37: #{tpu_custom_call.1} parent=1 // pred_fallthru
      _
    %v74 = vld [vmem:[#allocation4] sm:$0xff]
    %v75 = vld [vmem:[#allocation4 + $0x8] sm:$0xff]
    %v76 = vld [vmem:[#allocation4 + $0x10] sm:$0xff]
    %v77 = vld [vmem:[#allocation4 + $0x18] sm:$0xff]
    %v78 = vld [vmem:[#allocation4 + $0x20] sm:$0xff]
    %v79 = vld [vmem:[#allocation4 + $0x28] sm:$0xff]
    %v80 = vpack.c.bf16 %v74, %v74
    %v81 = vpack.c.bf16 %v75, %v75
    %v82 = vpack.c.bf16 %v76, %v76
    %v83 = vpack.c.bf16 %v77, %v77
    %v84 = vpack.c.bf16 %v78, %v78
    %v85 = vpack.c.bf16 %v79, %v79
    %v86 = vld [vmem:[#allocation2] sm:$0xff]
    %v87 = vld [vmem:[#allocation7] sm:$0xf]
    %v88 = vld [vmem:[#allocation7 + $0x4] sm:$0xf]
    %v89 = vld [vmem:[#allocation7 + $0x8] sm:$0xf]
    %v90 = vld [vmem:[#allocation7 + $0xc] sm:$0xf]
    %v91 = vld [vmem:[#allocation7 + $0x10] sm:$0xf]
    %v92 = vld [vmem:[#allocation7 + $0x14] sm:$0xf]
    %v93 = vld [vmem:[#allocation7 + $0x18] sm:$0xf]
    %v94 = vld [vmem:[#allocation7 + $0x1c] sm:$0xf]
    %v95 = vld [vmem:[#allocation7 + $0x20] sm:$0xf]
    %v96 = vld [vmem:[#allocation7 + $0x24] sm:$0xf]
    %v97 = vld [vmem:[#allocation7 + $0x28] sm:$0xf]
    %v98 = vld [vmem:[#allocation7 + $0x2c] sm:$0xf]
    %v99 = vld [vmem:[#allocation7 + $0x30] sm:$0xf]
    %v100 = vld [vmem:[#allocation7 + $0x34] sm:$0xf]
    %v101 = vld [vmem:[#allocation7 + $0x38] sm:$0xf]
    %v102 = vld [vmem:[#allocation7 + $0x3c] sm:$0xf]
    %v103 = vld [vmem:[#allocation7 + $0x40] sm:$0xf]
    %v104 = vld [vmem:[#allocation7 + $0x44] sm:$0xf]
    %v105 = vld [vmem:[#allocation7 + $0x48] sm:$0xf]
    %v106 = vld [vmem:[#allocation7 + $0x4c] sm:$0xf]
    %v107 = vld [vmem:[#allocation7 + $0x50] sm:$0xf]
    %v108 = vld [vmem:[#allocation7 + $0x54] sm:$0xf]
    %v109 = vld [vmem:[#allocation7 + $0x58] sm:$0xf]
    %v110 = vld [vmem:[#allocation7 + $0x5c] sm:$0xf]
    %v111 = vld [vmem:[#allocation7 + $0x60] sm:$0xf]
    %v112 = vld [vmem:[#allocation7 + $0x64] sm:$0xf]
    %v113 = vld [vmem:[#allocation7 + $0x68] sm:$0xf]
    %v114 = vld [vmem:[#allocation7 + $0x6c] sm:$0xf]
    %v115 = vld [vmem:[#allocation7 + $0x70] sm:$0xf]
    %v116 = vld [vmem:[#allocation7 + $0x74] sm:$0xf]
    %v117 = vld [vmem:[#allocation7 + $0x78] sm:$0xf]
    %v118 = vld [vmem:[#allocation7 + $0x7c] sm:$0xf]
    %v119 = vld [vmem:[#allocation7 + $0x80] sm:$0xf]
    %v120 = vld [vmem:[#allocation7 + $0x84] sm:$0xf]
    %v121 = vld [vmem:[#allocation7 + $0x88] sm:$0xf]
    %v122 = vld [vmem:[#allocation7 + $0x8c] sm:$0xf]
    %v123 = vld [vmem:[#allocation7 + $0x90] sm:$0xf]
    %v124 = vld [vmem:[#allocation7 + $0x94] sm:$0xf]
    %v125 = vld [vmem:[#allocation7 + $0x98] sm:$0xf]
    %v126 = vld [vmem:[#allocation7 + $0x9c] sm:$0xf]
    %v127 = vld [vmem:[#allocation7 + $0xa0] sm:$0xf]
    %v128 = vld [vmem:[#allocation7 + $0xa4] sm:$0xf]
    %v129 = vld [vmem:[#allocation7 + $0xa8] sm:$0xf]
    %v130 = vld [vmem:[#allocation7 + $0xac] sm:$0xf]
    %v131 = vld [vmem:[#allocation7 + $0xb0] sm:$0xf]
    %v132 = vld [vmem:[#allocation7 + $0xb4] sm:$0xf]
    %v133 = vld [vmem:[#allocation7 + $0xb8] sm:$0xf]
    %v134 = vld [vmem:[#allocation7 + $0xbc] sm:$0xf]
    %v135 = vld [vmem:[#allocation7 + $0xc0] sm:$0xf]
    %v136 = vld [vmem:[#allocation7 + $0xc4] sm:$0xf]
    %v137 = vld [vmem:[#allocation7 + $0xc8] sm:$0xf]
    %v138 = vld [vmem:[#allocation7 + $0xcc] sm:$0xf]
    %v139 = vld [vmem:[#allocation7 + $0xd0] sm:$0xf]
    %v140 = vld [vmem:[#allocation7 + $0xd4] sm:$0xf]
    %v141 = vld [vmem:[#allocation7 + $0xd8] sm:$0xf]
    %v142 = vld [vmem:[#allocation7 + $0xdc] sm:$0xf]
    %v143 = vld [vmem:[#allocation7 + $0xe0] sm:$0xf]
    %v144 = vld [vmem:[#allocation7 + $0xe4] sm:$0xf]
    %v145 = vld [vmem:[#allocation7 + $0xe8] sm:$0xf]
    %v146 = vld [vmem:[#allocation7 + $0xec] sm:$0xf]
    %v147 = vld [vmem:[#allocation7 + $0xf0] sm:$0xf]
    %v148 = vld [vmem:[#allocation7 + $0xf4] sm:$0xf]
    %v149 = vld [vmem:[#allocation7 + $0xf8] sm:$0xf]
    %v150 = vld [vmem:[#allocation7 + $0xfc] sm:$0xf]
    %v151 = vld [vmem:[#allocation7 + $0x100] sm:$0xf]
    %v152 = vld [vmem:[#allocation7 + $0x104] sm:$0xf]
    %v153 = vld [vmem:[#allocation7 + $0x108] sm:$0xf]
    %v154 = vld [vmem:[#allocation7 + $0x10c] sm:$0xf]
    %v155 = vld [vmem:[#allocation7 + $0x110] sm:$0xf]
    %v156 = vld [vmem:[#allocation7 + $0x114] sm:$0xf]
    %v157 = vld [vmem:[#allocation7 + $0x118] sm:$0xf]
    %v158 = vld [vmem:[#allocation7 + $0x11c] sm:$0xf]
    %v159 = vld [vmem:[#allocation7 + $0x120] sm:$0xf]
    %v160 = vld [vmem:[#allocation7 + $0x124] sm:$0xf]
    %v161 = vld [vmem:[#allocation7 + $0x128] sm:$0xf]
    %v162 = vld [vmem:[#allocation7 + $0x12c] sm:$0xf]
    %v163 = vld [vmem:[#allocation7 + $0x130] sm:$0xf]
    %v164 = vld [vmem:[#allocation7 + $0x134] sm:$0xf]
    %v165 = vld [vmem:[#allocation7 + $0x138] sm:$0xf]
    %v166 = vld [vmem:[#allocation7 + $0x13c] sm:$0xf]
    %v167 = vld [vmem:[#allocation7 + $0x140] sm:$0xf]
    %v168 = vld [vmem:[#allocation7 + $0x144] sm:$0xf]
    %v169 = vld [vmem:[#allocation7 + $0x148] sm:$0xf]
    %v170 = vld [vmem:[#allocation7 + $0x14c] sm:$0xf]
    %v171 = vld [vmem:[#allocation7 + $0x150] sm:$0xf]
    %v172 = vld [vmem:[#allocation7 + $0x154] sm:$0xf]
    %v173 = vld [vmem:[#allocation7 + $0x158] sm:$0xf]
    %v174 = vld [vmem:[#allocation7 + $0x15c] sm:$0xf]
    %v175 = vld [vmem:[#allocation7 + $0x160] sm:$0xf]
    %v176 = vld [vmem:[#allocation7 + $0x164] sm:$0xf]
    %v177 = vld [vmem:[#allocation7 + $0x168] sm:$0xf]
    %v178 = vld [vmem:[#allocation7 + $0x16c] sm:$0xf]
    %v179 = vld [vmem:[#allocation7 + $0x170] sm:$0xf]
    %v180 = vld [vmem:[#allocation7 + $0x174] sm:$0xf]
    %v181 = vld [vmem:[#allocation7 + $0x178] sm:$0xf]
    %v182 = vld [vmem:[#allocation7 + $0x17c] sm:$0xf]
    %v279 = vunpack.c.l.b16 %v87
    %v280 = vunpack.c.l.b16 %v88
    %v281 = vunpack.c.l.b16 %v89
    %v282 = vunpack.c.l.b16 %v90
    %v283 = vunpack.c.l.b16 %v91
    %v284 = vunpack.c.l.b16 %v92
    %v285 = vunpack.c.l.b16 %v93
    %v286 = vunpack.c.l.b16 %v94
    %v287 = vunpack.c.l.b16 %v95
    %v288 = vunpack.c.l.b16 %v96
    %v289 = vunpack.c.l.b16 %v97
    %v290 = vunpack.c.l.b16 %v98
    %v291 = vunpack.c.l.b16 %v99
    %v292 = vunpack.c.l.b16 %v100
    %v293 = vunpack.c.l.b16 %v101
    %v294 = vunpack.c.l.b16 %v102
    %v295 = vunpack.c.l.b16 %v103
    %v296 = vunpack.c.l.b16 %v104
    %v297 = vunpack.c.l.b16 %v105
    %v298 = vunpack.c.l.b16 %v106
    %v299 = vunpack.c.l.b16 %v107
    %v300 = vunpack.c.l.b16 %v108
    %v301 = vunpack.c.l.b16 %v109
    %v302 = vunpack.c.l.b16 %v110
    %v303 = vunpack.c.l.b16 %v111
    %v304 = vunpack.c.l.b16 %v112
    %v305 = vunpack.c.l.b16 %v113
    %v306 = vunpack.c.l.b16 %v114
    %v307 = vunpack.c.l.b16 %v115
    %v308 = vunpack.c.l.b16 %v116
    %v309 = vunpack.c.l.b16 %v117
    %v310 = vunpack.c.l.b16 %v118
    %v311 = vunpack.c.l.b16 %v119
    %v312 = vunpack.c.l.b16 %v120
    %v313 = vunpack.c.l.b16 %v121
    %v314 = vunpack.c.l.b16 %v122
    %v315 = vunpack.c.l.b16 %v123
    %v316 = vunpack.c.l.b16 %v124
    %v317 = vunpack.c.l.b16 %v125
    %v318 = vunpack.c.l.b16 %v126
    %v319 = vunpack.c.l.b16 %v127
    %v320 = vunpack.c.l.b16 %v128
    %v321 = vunpack.c.l.b16 %v129
    %v322 = vunpack.c.l.b16 %v130
    %v323 = vunpack.c.l.b16 %v131
    %v324 = vunpack.c.l.b16 %v132
    %v325 = vunpack.c.l.b16 %v133
    %v326 = vunpack.c.l.b16 %v134
    %v327 = vunpack.c.l.b16 %v135
    %v328 = vunpack.c.l.b16 %v136
    %v329 = vunpack.c.l.b16 %v137
    %v330 = vunpack.c.l.b16 %v138
    %v331 = vunpack.c.l.b16 %v139
    %v332 = vunpack.c.l.b16 %v140
    %v333 = vunpack.c.l.b16 %v141
    %v334 = vunpack.c.l.b16 %v142
    %v335 = vunpack.c.l.b16 %v143
    %v336 = vunpack.c.l.b16 %v144
    %v337 = vunpack.c.l.b16 %v145
    %v338 = vunpack.c.l.b16 %v146
    %v339 = vunpack.c.l.b16 %v147
    %v340 = vunpack.c.l.b16 %v148
    %v341 = vunpack.c.l.b16 %v149
    %v342 = vunpack.c.l.b16 %v150
    %v343 = vunpack.c.l.b16 %v151
    %v344 = vunpack.c.l.b16 %v152
    %v345 = vunpack.c.l.b16 %v153
    %v346 = vunpack.c.l.b16 %v154
    %v347 = vunpack.c.l.b16 %v155
    %v348 = vunpack.c.l.b16 %v156
    %v349 = vunpack.c.l.b16 %v157
    %v350 = vunpack.c.l.b16 %v158
    %v351 = vunpack.c.l.b16 %v159
    %v352 = vunpack.c.l.b16 %v160
    %v353 = vunpack.c.l.b16 %v161
    %v354 = vunpack.c.l.b16 %v162
    %v355 = vunpack.c.l.b16 %v163
    %v356 = vunpack.c.l.b16 %v164
    %v357 = vunpack.c.l.b16 %v165
    %v358 = vunpack.c.l.b16 %v166
    %v359 = vunpack.c.l.b16 %v167
    %v360 = vunpack.c.l.b16 %v168
    %v361 = vunpack.c.l.b16 %v169
    %v362 = vunpack.c.l.b16 %v170
    %v363 = vunpack.c.l.b16 %v171
    %v364 = vunpack.c.l.b16 %v172
    %v365 = vunpack.c.l.b16 %v173
    %v366 = vunpack.c.l.b16 %v174
    %v367 = vunpack.c.l.b16 %v175
    %v368 = vunpack.c.l.b16 %v176
    %v369 = vunpack.c.l.b16 %v177
    %v370 = vunpack.c.l.b16 %v178
    %v371 = vunpack.c.l.b16 %v179
    %v372 = vunpack.c.l.b16 %v180
    %v373 = vunpack.c.l.b16 %v181
    %v374 = vunpack.c.l.b16 %v182
    %v375 = vpack.c.b16 %v280, %v279
    %v376 = vpack.c.b16 %v282, %v281
    %v377 = vpack.c.b16 %v284, %v283
    %v378 = vpack.c.b16 %v286, %v285
    %v379 = vpack.c.b16 %v288, %v287
    %v380 = vpack.c.b16 %v290, %v289
    %v381 = vpack.c.b16 %v292, %v291
    %v382 = vpack.c.b16 %v294, %v293
    %v383 = vpack.c.b16 %v296, %v295
    %v384 = vpack.c.b16 %v298, %v297
    %v385 = vpack.c.b16 %v300, %v299
    %v386 = vpack.c.b16 %v302, %v301
    %v387 = vpack.c.b16 %v304, %v303
    %v388 = vpack.c.b16 %v306, %v305
    %v389 = vpack.c.b16 %v308, %v307
    %v390 = vpack.c.b16 %v310, %v309
    %v391 = vpack.c.b16 %v312, %v311
    %v392 = vpack.c.b16 %v314, %v313
    %v393 = vpack.c.b16 %v316, %v315
    %v394 = vpack.c.b16 %v318, %v317
    %v395 = vpack.c.b16 %v320, %v319
    %v396 = vpack.c.b16 %v322, %v321
    %v397 = vpack.c.b16 %v324, %v323
    %v398 = vpack.c.b16 %v326, %v325
    %v399 = vpack.c.b16 %v328, %v327
    %v400 = vpack.c.b16 %v330, %v329
    %v401 = vpack.c.b16 %v332, %v331
    %v402 = vpack.c.b16 %v334, %v333
    %v403 = vpack.c.b16 %v336, %v335
    %v404 = vpack.c.b16 %v338, %v337
    %v405 = vpack.c.b16 %v340, %v339
    %v406 = vpack.c.b16 %v342, %v341
    %v407 = vpack.c.b16 %v344, %v343
    %v408 = vpack.c.b16 %v346, %v345
    %v409 = vpack.c.b16 %v348, %v347
    %v410 = vpack.c.b16 %v350, %v349
    %v411 = vpack.c.b16 %v352, %v351
    %v412 = vpack.c.b16 %v354, %v353
    %v413 = vpack.c.b16 %v356, %v355
    %v414 = vpack.c.b16 %v358, %v357
    %v415 = vpack.c.b16 %v360, %v359
    %v416 = vpack.c.b16 %v362, %v361
    %v417 = vpack.c.b16 %v364, %v363
    %v418 = vpack.c.b16 %v366, %v365
    %v419 = vpack.c.b16 %v368, %v367
    %v420 = vpack.c.b16 %v370, %v369
    %v421 = vpack.c.b16 %v372, %v371
    %v422 = vpack.c.b16 %v374, %v373
    %471 = vmatprep.subr.bf16.mxu0 0
    %472 = vmatpush1.bf16.msra.mxu0 %v382
    %473 = vmatprep.subr.bf16.mxu0 0
    %474 = vmatpush1.bf16.msra.mxu0 %v381
    %475 = vmatprep.subr.bf16.mxu0 0
    %476 = vmatpush1.bf16.msra.mxu0 %v380
    %477 = vmatprep.subr.bf16.mxu0 0
    %478 = vmatpush1.bf16.msra.mxu0 %v379
    %479 = vmatprep.subr.bf16.mxu0 0
    %480 = vmatpush1.bf16.msra.mxu0 %v378
    %481 = vmatprep.subr.bf16.mxu0 0
    %482 = vmatpush1.bf16.msra.mxu0 %v377
    %483 = vmatprep.subr.bf16.mxu0 0
    %484 = vmatpush1.bf16.msra.mxu0 %v376
    %485 = vmatprep.subr.bf16.mxu0 0
    %486 = vmatpush1.bf16.msra.mxu0 %v375
    %487 = vmatprep.subr.bf16.mxu0 0
    %488 = vmatpush2.bf16.msra.mxu0 %v390
    %489 = vmatprep.subr.bf16.mxu0 0
    %490 = vmatpush2.bf16.msra.mxu0 %v389
    %491 = vmatprep.subr.bf16.mxu0 0
    %492 = vmatpush2.bf16.msra.mxu0 %v388
    %493 = vmatprep.subr.bf16.mxu0 0
    %494 = vmatpush2.bf16.msra.mxu0 %v387
    %495 = vmatprep.subr.bf16.mxu0 0
    %496 = vmatpush2.bf16.msra.mxu0 %v386
    %497 = vmatprep.subr.bf16.mxu0 0
    %498 = vmatpush2.bf16.msra.mxu0 %v385
    %499 = vmatprep.subr.bf16.mxu0 0
    %500 = vmatpush2.bf16.msra.mxu0 %v384
    %501 = vmatprep.subr.bf16.mxu0 0
    %502 = vmatpush2.bf16.msra.mxu0 %v383
    %503 = vmatprep.mubr.bf16.mxu0 %v81
    %504 = vmatmul.mubr.bf16.gmra.mxu0 %v80
    %v505 = vpop.f32.mrf.mxu0
    %v506 = vadd.f32 0.0, %v505
    %v507 = vpop.f32.mrf.mxu0
    %v508 = vpop.f32.mrf.mxu0
    %v509 = vpop.f32.mrf.mxu0
    %510 = vdwg.mxu0
    %511 = vmatprep.subr.bf16.mxu0 0
    %512 = vmatpush1.bf16.msra.mxu0 %v398
    %513 = vmatprep.subr.bf16.mxu0 0
    %514 = vmatpush1.bf16.msra.mxu0 %v397
    %515 = vmatprep.subr.bf16.mxu0 0
    %516 = vmatpush1.bf16.msra.mxu0 %v396
    %517 = vmatprep.subr.bf16.mxu0 0
    %518 = vmatpush1.bf16.msra.mxu0 %v395
    %519 = vmatprep.subr.bf16.mxu0 0
    %520 = vmatpush1.bf16.msra.mxu0 %v394
    %521 = vmatprep.subr.bf16.mxu0 0
    %522 = vmatpush1.bf16.msra.mxu0 %v393
    %523 = vmatprep.subr.bf16.mxu0 0
    %524 = vmatpush1.bf16.msra.mxu0 %v392
    %525 = vmatprep.subr.bf16.mxu0 0
    %526 = vmatpush1.bf16.msra.mxu0 %v391
    %527 = vmatprep.subr.bf16.mxu0 0
    %528 = vmatpush2.bf16.msra.mxu0 %v406
    %529 = vmatprep.subr.bf16.mxu0 0
    %530 = vmatpush2.bf16.msra.mxu0 %v405
    %531 = vmatprep.subr.bf16.mxu0 0
    %532 = vmatpush2.bf16.msra.mxu0 %v404
    %533 = vmatprep.subr.bf16.mxu0 0
    %534 = vmatpush2.bf16.msra.mxu0 %v403
    %535 = vmatprep.subr.bf16.mxu0 0
    %536 = vmatpush2.bf16.msra.mxu0 %v402
    %537 = vmatprep.subr.bf16.mxu0 0
    %538 = vmatpush2.bf16.msra.mxu0 %v401
    %539 = vmatprep.subr.bf16.mxu0 0
    %540 = vmatpush2.bf16.msra.mxu0 %v400
    %541 = vmatprep.subr.bf16.mxu0 0
    %542 = vmatpush2.bf16.msra.mxu0 %v399
    %543 = vmatprep.mubr.bf16.mxu0 %v83
    %544 = vmatmul.mubr.bf16.gmra.mxu0 %v82
    %v545 = vpop.f32.mrf.mxu0
    %v546 = vadd.f32 %v506, %v545
    %v547 = vpop.f32.mrf.mxu0
    %v548 = vpop.f32.mrf.mxu0
    %v549 = vpop.f32.mrf.mxu0
    %550 = vdwg.mxu0
    %551 = vmatprep.subr.bf16.mxu0 0
    %552 = vmatpush1.bf16.msra.mxu0 %v414
    %553 = vmatprep.subr.bf16.mxu0 0
    %554 = vmatpush1.bf16.msra.mxu0 %v413
    %555 = vmatprep.subr.bf16.mxu0 0
    %556 = vmatpush1.bf16.msra.mxu0 %v412
    %557 = vmatprep.subr.bf16.mxu0 0
    %558 = vmatpush1.bf16.msra.mxu0 %v411
    %559 = vmatprep.subr.bf16.mxu0 0
    %560 = vmatpush1.bf16.msra.mxu0 %v410
    %561 = vmatprep.subr.bf16.mxu0 0
    %562 = vmatpush1.bf16.msra.mxu0 %v409
    %563 = vmatprep.subr.bf16.mxu0 0
    %564 = vmatpush1.bf16.msra.mxu0 %v408
    %565 = vmatprep.subr.bf16.mxu0 0
    %566 = vmatpush1.bf16.msra.mxu0 %v407
    %567 = vmatprep.subr.bf16.mxu0 0
    %568 = vmatpush2.bf16.msra.mxu0 %v422
    %569 = vmatprep.subr.bf16.mxu0 0
    %570 = vmatpush2.bf16.msra.mxu0 %v421
    %571 = vmatprep.subr.bf16.mxu0 0
    %572 = vmatpush2.bf16.msra.mxu0 %v420
    %573 = vmatprep.subr.bf16.mxu0 0
    %574 = vmatpush2.bf16.msra.mxu0 %v419
    %575 = vmatprep.subr.bf16.mxu0 0
    %576 = vmatpush2.bf16.msra.mxu0 %v418
    %577 = vmatprep.subr.bf16.mxu0 0
    %578 = vmatpush2.bf16.msra.mxu0 %v417
    %579 = vmatprep.subr.bf16.mxu0 0
    %580 = vmatpush2.bf16.msra.mxu0 %v416
    %581 = vmatprep.subr.bf16.mxu0 0
    %582 = vmatpush2.bf16.msra.mxu0 %v415
    %583 = vmatprep.mubr.bf16.mxu0 %v85
    %584 = vmatmul.mubr.bf16.gmra.mxu0 %v84
    %v585 = vpop.f32.mrf.mxu0
    %v586 = vadd.f32 %v546, %v585
    %v587 = vpop.f32.mrf.mxu0
    %v588 = vpop.f32.mrf.mxu0
    %v589 = vpop.f32.mrf.mxu0
    %590 = vdwg.mxu0
    %v591 = vadd.f32 %v86, %v586
    %592 = vst [vmem:[#allocation2] sm:$0xff] %v591
    // Predicated region
    $region38: #{tpu_custom_call.1} parent=1 // pred_check
      %p593 = pneg %p62
    $region39: #{tpu_custom_call.1} parent=1 // pred_check_branch
      %595 = sbr.rel (%p593) target = $region41
    $region40: #{tpu_custom_call.1} parent=1 // pred_region
      %v596 = vld [vmem:[#allocation2] sm:$0xff]
      %v597 = vmul.f32 %v596, %v596
      %598 = vadd.xlane.f32.xlu0 %v597
      %v599 = vpop.xlane.xlu0 %598
      %v600 = vadd.f32 %v599, 1e-12
      %v601 = vrsqrt.pop %v600
      %s602 = sld [smem:[#allocation3]]
      %v603 = vstv %s602
      %v604 = vmul.f32 %v601, %v603
      %v605 = vmul.f32 %v596, %v604
      %v606 = vpack.c.bf16 %v605, %v605
      %v607 = vld [vmem:[#allocation9] sm:$0xf]
      %v608 = vld [vmem:[#allocation9 + $0x4] sm:$0xf]
      %v609 = vld [vmem:[#allocation9 + $0x8] sm:$0xf]
      %v610 = vld [vmem:[#allocation9 + $0xc] sm:$0xf]
      %v611 = vld [vmem:[#allocation9 + $0x10] sm:$0xf]
      %v612 = vld [vmem:[#allocation9 + $0x14] sm:$0xf]
      %v613 = vld [vmem:[#allocation9 + $0x18] sm:$0xf]
      %v614 = vld [vmem:[#allocation9 + $0x1c] sm:$0xf]
      %v615 = vld [vmem:[#allocation9 + $0x20] sm:$0xf]
      %v616 = vld [vmem:[#allocation9 + $0x24] sm:$0xf]
      %v617 = vld [vmem:[#allocation9 + $0x28] sm:$0xf]
      %v618 = vld [vmem:[#allocation9 + $0x2c] sm:$0xf]
      %v619 = vld [vmem:[#allocation9 + $0x30] sm:$0xf]
      %v620 = vld [vmem:[#allocation9 + $0x34] sm:$0xf]
      %v621 = vld [vmem:[#allocation9 + $0x38] sm:$0xf]
      %v622 = vld [vmem:[#allocation9 + $0x3c] sm:$0xf]
      %v639 = vunpack.c.l.b16 %v607
      %v640 = vunpack.c.l.b16 %v608
      %v641 = vunpack.c.l.b16 %v609
      %v642 = vunpack.c.l.b16 %v610
      %v643 = vunpack.c.l.b16 %v611
      %v644 = vunpack.c.l.b16 %v612
      %v645 = vunpack.c.l.b16 %v613
      %v646 = vunpack.c.l.b16 %v614
      %v647 = vunpack.c.l.b16 %v615
      %v648 = vunpack.c.l.b16 %v616
      %v649 = vunpack.c.l.b16 %v617
      %v650 = vunpack.c.l.b16 %v618
      %v651 = vunpack.c.l.b16 %v619
      %v652 = vunpack.c.l.b16 %v620
      %v653 = vunpack.c.l.b16 %v621
      %v654 = vunpack.c.l.b16 %v622
      %v655 = vpack.c.b16 %v640, %v639
      %v656 = vpack.c.b16 %v642, %v641
      %v657 = vpack.c.b16 %v644, %v643
      %v658 = vpack.c.b16 %v646, %v645
      %v659 = vpack.c.b16 %v648, %v647
      %v660 = vpack.c.b16 %v650, %v649
      %v661 = vpack.c.b16 %v652, %v651
      %v662 = vpack.c.b16 %v654, %v653
      %671 = vmatprep.subr.bf16.mxu0 0
      %672 = vmatpush1.bf16.msra.mxu0 %v662
      %673 = vmatprep.subr.bf16.mxu0 0
      %674 = vmatpush1.bf16.msra.mxu0 %v661
      %675 = vmatprep.subr.bf16.mxu0 0
      %676 = vmatpush1.bf16.msra.mxu0 %v660
      %677 = vmatprep.subr.bf16.mxu0 0
      %678 = vmatpush1.bf16.msra.mxu0 %v659
      %679 = vmatprep.subr.bf16.mxu0 0
      %680 = vmatpush1.bf16.msra.mxu0 %v658
      %681 = vmatprep.subr.bf16.mxu0 0
      %682 = vmatpush1.bf16.msra.mxu0 %v657
      %683 = vmatprep.subr.bf16.mxu0 0
      %684 = vmatpush1.bf16.msra.mxu0 %v656
      %685 = vmatprep.subr.bf16.mxu0 0
      %686 = vmatpush1.bf16.msra.mxu0 %v655
      %687 = vmatprep.subr.bf16.mxu0 0
      %688 = vmatpush2.bf16.msra.mxu0 0
      %689 = vmatprep.subr.bf16.mxu0 0
      %690 = vmatpush2.bf16.msra.mxu0 0
      %691 = vmatprep.subr.bf16.mxu0 0
      %692 = vmatpush2.bf16.msra.mxu0 0
      %693 = vmatprep.subr.bf16.mxu0 0
      %694 = vmatpush2.bf16.msra.mxu0 0
      %695 = vmatprep.subr.bf16.mxu0 0
      %696 = vmatpush2.bf16.msra.mxu0 0
      %697 = vmatprep.subr.bf16.mxu0 0
      %698 = vmatpush2.bf16.msra.mxu0 0
      %699 = vmatprep.subr.bf16.mxu0 0
      %700 = vmatpush2.bf16.msra.mxu0 0
      %701 = vmatprep.subr.bf16.mxu0 0
      %702 = vmatpush2.bf16.msra.mxu0 0
      %703 = vmatprep.mubr.bf16.mxu0 0
      %704 = vmatmul.mubr.bf16.gmra.mxu0 %v606
      %v705 = vpop.f32.mrf.mxu0
      %v706 = vadd.f32 0.0, %v705
      %v707 = vpop.f32.mrf.mxu0
      %v708 = vpop.f32.mrf.mxu0
      %v709 = vpop.f32.mrf.mxu0
      %710 = vdwg.mxu0
      %711 = vst [vmem:[#allocation10] sm:$0xff] %v706
    $region41: #{tpu_custom_call.1} parent=1 // pred_fallthru
      _
    // Predicated region
    $region42: #{tpu_custom_call.1} parent=1 // pred_check
      _
    $region43: #{tpu_custom_call.1} parent=1 // pred_check_branch
      %713 = sbr.rel (0) target = $region45
    $region44: #{tpu_custom_call.1} parent=1 // pred_region
      %s715 = ssub.s32 128, 128
      %716 = vsyncadd [#allocation6], %s715
      %s718 = sshll.u32 [#allocation10], 4
      %s719 = int_to_ptr.vmem [resolvable:$true] %s718
      %721 = dma.vmem_to_hbm [thread:$0]  %s719, 128, %s5, [#allocation6]
    $region45: #{tpu_custom_call.1} parent=1 // pred_fallthru
      _
    // Predicated region
    $region46: #{tpu_custom_call.1} parent=1 // pred_check
      _
    $region47: #{tpu_custom_call.1} parent=1 // pred_check_branch
      %723 = sbr.rel (0) target = $region49
    $region48: #{tpu_custom_call.1} parent=1 // pred_region
      %724 = dma.done [#allocation6], 128
    $region49: #{tpu_custom_call.1} parent=1 // pred_fallthru
      _
    %725 = vsyncpa [#allocation5], 1
    %726 = vsyncpa [#allocation8], 1
    %727 = vsyncpa [#allocation6], 1

</llo_original>
